<compile_context>
chip_gen: v6e
topology: v6e:2x2x1
jax: 0.10.0
libtpu: 0.0.40
codegen_flags: <defaults>
</compile_context>

<pallas_src>
import jax
import jax.numpy as jnp
import numpy as np
from jax import lax
from jax.experimental import pallas as pl
from jax.experimental.pallas import tpu as pltpu

# ESM alphabet padding index (esm.data.Alphabet standard alphabets use 1).
PADDING_IDX = 1


def _make_avg_pool_kernel(padding_idx):
    def kernel(tokens_ref, hidden_ref, out_ref, acc_ref, den_ref):
        """One (batch_tile, seq_tile) grid step of the masked-mean reduction.

        tokens_ref : [TB, TS]    int32
        hidden_ref : [TB, TS, D] f32 / bf16
        out_ref    : [TB, D]     (resident across the seq axis)
        acc_ref    : [TB, D]     f32 VMEM scratch (numerator accumulator)
        den_ref    : [TB, 1]     f32 VMEM scratch (valid-token count)
        """
        s = pl.program_id(1)

        @pl.when(s == 0)
        def _init():
            acc_ref[...] = jnp.zeros_like(acc_ref)
            den_ref[...] = jnp.zeros_like(den_ref)

        tokens = tokens_ref[...]                       # [TB, TS]
        hidden = hidden_ref[...]                       # [TB, TS, D]

        # attention_mask = 1 - tokens.eq(padding_idx); keep f32 for exact
        # counting even when hidden is bf16.
        mask_f32 = 1.0 - (tokens == padding_idx).astype(jnp.float32)  # [TB, TS]

        # Masked sum over this sequence tile on the MXU:
        #   [TB, 1, TS] @ [TB, TS, D] -> [TB, 1, D]
        # (HIGHEST precision so f32 hidden states are not rounded to bf16.)
        partial = jnp.einsum(
            "bqs,bsd->bqd",
            mask_f32[:, None, :].astype(hidden.dtype),
            hidden,
            preferred_element_type=jnp.float32,
            precision=lax.Precision.HIGHEST,
        )
        acc_ref[...] += partial[:, 0, :]
        den_ref[...] += jnp.sum(mask_f32, axis=-1, keepdims=True)

        @pl.when(s == pl.num_programs(1) - 1)
        def _finalize():
            # Reciprocal-multiply finalize (approx=False to keep 1e-5 accuracy).
            # NOTE: a fully-padded row gives den==0 -> inf/nan, matching the
            # PyTorch reference's divide-by-zero behavior.
            out_ref[...] = (
                acc_ref[...] * pl.reciprocal(den_ref[...], approx=False)
            ).astype(out_ref.dtype)

    return kernel


def _choose_seq_tile(S, TB, D, itemsize, max_tile_bytes):
    """Largest sequence tile that (a) divides S, (b) satisfies the (8,128)
    block constraints for both the [TB,TS] token block and the [TB,TS,D]
    hidden block, and (c) keeps one hidden tile under the VMEM budget."""
    bytes_per_s = TB * D * itemsize
    for ts in (2048, 1024, 512, 256, 128):   # multiples of 128 -> legal for tokens
        if S % ts == 0 and ts * bytes_per_s <= max_tile_bytes:
            return ts
    return S   # fall back to the full sequence as a single block


def pooler_avg(tokens, outputs, *, padding_idx=PADDING_IDX,
               max_tile_bytes=8 * 1024 * 1024):
    """'avg' pooling: masked mean of last hidden states over the sequence."""
    B, S, D = outputs.shape
    assert tokens.shape == (B, S)
    tokens = tokens.astype(jnp.int32)

    # Batch tile: multiple of 8 (sublane) when possible so the batch grid axis
    # can be sharded across TensorCores; otherwise the full (small) batch.
    TB = 8 if (B % 8 == 0 and B > 8) else B
    TS = _choose_seq_tile(S, TB, D, outputs.dtype.itemsize, max_tile_bytes)
    grid = (B // TB, S // TS)

    # Raise scoped VMEM only if the double-buffered working set needs it
    # (2 hidden tiles + 2 token tiles + accumulators); 48 MiB is safe on
    # v5e/v6e (128 MiB physical) and v7x (64 MiB physical).
    working_set = 2 * (TB * TS * D * outputs.dtype.itemsize + TB * TS * 4) \
        + TB * (D + 128) * 4
    cp_kwargs = dict(dimension_semantics=("parallel", "arbitrary"))
    if working_set > (14 << 20):
        cp_kwargs["vmem_limit_bytes"] = 48 * 1024 * 1024

    return pl.pallas_call(
        _make_avg_pool_kernel(padding_idx),
        out_shape=jax.ShapeDtypeStruct((B, D), outputs.dtype),
        grid_spec=pltpu.PrefetchScalarGridSpec(
            num_scalar_prefetch=0,
            grid=grid,
            in_specs=[
                # tokens tile follows the hidden tile's (i, s) block indices.
                pl.BlockSpec((TB, TS), lambda i, s: (i, s)),
                pl.BlockSpec((TB, TS, D), lambda i, s: (i, s, 0)),
            ],
            # Output block is independent of the seq index -> accumulator-resident.
            out_specs=pl.BlockSpec((TB, D), lambda i, s: (i, 0)),
            scratch_shapes=[
                pltpu.VMEM((TB, D), jnp.float32),   # numerator accumulator
                pltpu.VMEM((TB, 1), jnp.float32),   # valid-token count
            ],
        ),
        compiler_params=pltpu.CompilerParams(**cp_kwargs),
    )(tokens, outputs)


def pooler(pooler_type, tokens, outputs):
    """Reproduces Pooler.forward."""
    assert pooler_type in ("cls", "avg"), f"unrecognized pooling type {pooler_type}"
    if pooler_type == "cls":
        # last_hidden[:, 0, 0] — a pure slice, no compute; kept as JAX glue.
        return outputs[:, 0, 0]
    return pooler_avg(tokens, outputs)


def _reference_avg(tokens, outputs, padding_idx=PADDING_IDX):
    mask = 1.0 - (tokens == padding_idx).astype(jnp.float32)
    num = (outputs.astype(jnp.float32) * mask[:, :, None]).sum(1)
    return (num / mask.sum(-1)[:, None]).astype(outputs.dtype)


if __name__ == "__main__":
    key = jax.random.PRNGKey(0)

    # ---- test 1: small shapes matching the module (single grid step) ----
    B, S, D = 2, 8, 32
    k_tok, k_hid, key = jax.random.split(key, 3)
    tokens = jax.random.randint(k_tok, (B, S), 0, 32, dtype=jnp.int32)
    tokens = tokens.at[:, -2:].set(PADDING_IDX)   # some padding positions
    tokens = tokens.at[:, 0].set(0)               # >=1 non-pad token per row
    outputs = jax.random.normal(k_hid, (B, S, D), dtype=jnp.float32)

    avg_out = jax.block_until_ready(pooler("avg", tokens, outputs))
    np.testing.assert_allclose(np.asarray(avg_out),
                               np.asarray(_reference_avg(tokens, outputs)),
                               rtol=1e-5, atol=1e-5)

    cls_out = jax.block_until_ready(pooler("cls", tokens, outputs))
    np.testing.assert_allclose(np.asarray(cls_out),
                               np.asarray(outputs[:, 0, 0]), rtol=0, atol=0)

    # ---- test 2: exercises the gridded accumulator (multiple seq steps) ----
    B2, S2, D2 = 8, 512, 128
    k_tok2, k_hid2, key = jax.random.split(key, 3)
    tokens2 = jax.random.randint(k_tok2, (B2, S2), 0, 32, dtype=jnp.int32)
    tokens2 = tokens2.at[:, -64:].set(PADDING_IDX)
    tokens2 = tokens2.at[:, 0].set(0)
    outputs2 = jax.random.normal(k_hid2, (B2, S2, D2), dtype=jnp.float32)

    # Small VMEM budget forces TS=128 -> grid=(1, 4), validating the
    # init/accumulate/finalize path across sequence steps.
    avg_out2 = jax.block_until_ready(
        pooler_avg(tokens2, outputs2, max_tile_bytes=768 * 1024))
    np.testing.assert_allclose(np.asarray(avg_out2),
                               np.asarray(_reference_avg(tokens2, outputs2)),
                               rtol=1e-4, atol=1e-4)

    print("KERNEL_OK")
</pallas_src>

<mosaic_0001>
module attributes {stable_mosaic.version = 11 : i64} {
  func.func @kernel(%arg0: i32, %arg1: i32, %arg2: memref<2x8xi32, #tpu.memory_space<vmem>>, %arg3: memref<2x8x32xf32, #tpu.memory_space<vmem>>, %arg4: memref<2x32xf32, #tpu.memory_space<vmem>>, %arg5: memref<2x32xf32, #tpu.memory_space<vmem>>, %arg6: memref<2x1xf32, #tpu.memory_space<vmem>>) attributes {dimension_semantics = [#tpu.dimension_semantics<parallel>, #tpu.dimension_semantics<arbitrary>], iteration_bounds = array<i64: 1, 1>, scalar_prefetch = 0 : i64, scratch_operands = 2 : i64, tpu.core_type = #tpu.core_type<tc>, window_params = [{transform_indices = @transform_0, window_bounds = array<i64: 2, 8>}, {transform_indices = @transform_1, window_bounds = array<i64: 2, 8, 32>}, {transform_indices = @transform_2, window_bounds = array<i64: 2, 32>}]} {
    %c0_i32 = arith.constant 0 : i32
    %0 = arith.cmpi eq, %arg1, %c0_i32 : i32
    %1 = arith.extui %0 : i1 to i32
    %c0_i32_0 = arith.constant 0 : i32
    %2 = arith.cmpi ne, %1, %c0_i32_0 : i32
    scf.if %2 {
      %cst_17 = arith.constant 0.000000e+00 : f32
      %25 = vector.broadcast %cst_17 : f32 to vector<2x32xf32>
      %c0_18 = arith.constant 0 : index
      %c0_19 = arith.constant 0 : index
      %26 = vector.load %arg5[%c0_18, %c0_19] : memref<2x32xf32, #tpu.memory_space<vmem>>, vector<2x32xf32>
      tpu.vector_store %arg5[%c0_18, %c0_19], %25 {strides = array<i32>} : memref<2x32xf32, #tpu.memory_space<vmem>>, vector<2x32xf32>,
      %cst_20 = arith.constant 0.000000e+00 : f32
      %27 = vector.broadcast %cst_20 : f32 to vector<2x1xf32>
      %c0_21 = arith.constant 0 : index
      %c0_22 = arith.constant 0 : index
      %28 = vector.load %arg6[%c0_21, %c0_22] : memref<2x1xf32, #tpu.memory_space<vmem>>, vector<2x1xf32>
      tpu.vector_store %arg6[%c0_21, %c0_22], %27 {strides = array<i32>} : memref<2x1xf32, #tpu.memory_space<vmem>>, vector<2x1xf32>,
    } else {
    }
    %c0 = arith.constant 0 : index
    %c0_1 = arith.constant 0 : index
    %3 = vector.load %arg2[%c0, %c0_1] : memref<2x8xi32, #tpu.memory_space<vmem>>, vector<2x8xi32>
    %c0_2 = arith.constant 0 : index
    %c0_3 = arith.constant 0 : index
    %c0_4 = arith.constant 0 : index
    %4 = vector.load %arg3[%c0_2, %c0_3, %c0_4] : memref<2x8x32xf32, #tpu.memory_space<vmem>>, vector<2x8x32xf32>
    %c1_i32 = arith.constant 1 : i32
    %5 = vector.broadcast %c1_i32 : i32 to vector<2x8xi32>
    %6 = arith.cmpi eq, %3, %5 : vector<2x8xi32>
    %7 = arith.extui %6 : vector<2x8xi1> to vector<2x8xi32>
    %8 = arith.sitofp %7 : vector<2x8xi32> to vector<2x8xf32>
    %cst = arith.constant 1.000000e+00 : f32
    %9 = vector.broadcast %cst : f32 to vector<2x8xf32>
    %10 = arith.subf %9, %8 : vector<2x8xf32>
    %11 = vector.shape_cast %10 : vector<2x8xf32> to vector<2x1x8xf32>
    "tpu.trace_start"() <{level = 10 : i32, message = "bqs,bsd->bqd"}> : () -> ()
    %cst_5 = arith.constant dense<0.000000e+00> : vector<2x1x32xf32>
    %12 = tpu.matmul %11, %4, %cst_5 {dimension_numbers = #tpu.dot_dimension_numbers<[2], [1], [1], [2], [0, 0, 0, 1, 1, 2], [0], [0]>, precision = #tpu.contract_precision<fp32>} : vector<2x1x8xf32>, vector<2x8x32xf32>, vector<2x1x32xf32> -> vector<2x1x32xf32>
    "tpu.trace_stop"() : () -> ()
    %c0_6 = arith.constant 0 : index
    %c0_7 = arith.constant 0 : index
    %13 = vector.load %arg5[%c0_6, %c0_7] : memref<2x32xf32, #tpu.memory_space<vmem>>, vector<2x32xf32>
    %14 = vector.shape_cast %12 : vector<2x1x32xf32> to vector<2x32xf32>
    %15 = arith.addf %13, %14 : vector<2x32xf32>
    %c0_8 = arith.constant 0 : index
    %c0_9 = arith.constant 0 : index
    %16 = vector.load %arg5[%c0_8, %c0_9] : memref<2x32xf32, #tpu.memory_space<vmem>>, vector<2x32xf32>
    tpu.vector_store %arg5[%c0_8, %c0_9], %15 {strides = array<i32>} : memref<2x32xf32, #tpu.memory_space<vmem>>, vector<2x32xf32>,
    %c0_10 = arith.constant 0 : index
    %c0_11 = arith.constant 0 : index
    %17 = vector.load %arg6[%c0_10, %c0_11] : memref<2x1xf32, #tpu.memory_space<vmem>>, vector<2x1xf32>
    %cst_12 = arith.constant dense<0.000000e+00> : vector<2xf32>
    %18 = vector.multi_reduction <add>, %10, %cst_12 [1] : vector<2x8xf32> to vector<2xf32>
    %19 = vector.shape_cast %18 : vector<2xf32> to vector<2x1xf32>
    %20 = arith.addf %17, %19 : vector<2x1xf32>
    %c0_13 = arith.constant 0 : index
    %c0_14 = arith.constant 0 : index
    %21 = vector.load %arg6[%c0_13, %c0_14] : memref<2x1xf32, #tpu.memory_space<vmem>>, vector<2x1xf32>
    tpu.vector_store %arg6[%c0_13, %c0_14], %20 {strides = array<i32>} : memref<2x1xf32, #tpu.memory_space<vmem>>, vector<2x1xf32>,
    %c0_i32_15 = arith.constant 0 : i32
    %22 = arith.cmpi eq, %arg1, %c0_i32_15 : i32
    %23 = arith.extui %22 : i1 to i32
    %c0_i32_16 = arith.constant 0 : i32
    %24 = arith.cmpi ne, %23, %c0_i32_16 : i32
    scf.if %24 {
      %c0_17 = arith.constant 0 : index
      %c0_18 = arith.constant 0 : index
      %25 = vector.load %arg5[%c0_17, %c0_18] : memref<2x32xf32, #tpu.memory_space<vmem>>, vector<2x32xf32>
      %c0_19 = arith.constant 0 : index
      %c0_20 = arith.constant 0 : index
      %26 = vector.load %arg6[%c0_19, %c0_20] : memref<2x1xf32, #tpu.memory_space<vmem>>, vector<2x1xf32>
      %27 = tpu.reciprocal %26 : vector<2x1xf32> -> vector<2x1xf32>
      %28 = vector.broadcast %27 : vector<2x1xf32> to vector<2x32xf32>
      %29 = arith.mulf %25, %28 : vector<2x32xf32>
      %c0_21 = arith.constant 0 : index
      %c0_22 = arith.constant 0 : index
      %30 = vector.load %arg4[%c0_21, %c0_22] : memref<2x32xf32, #tpu.memory_space<vmem>>, vector<2x32xf32>
      tpu.vector_store %arg4[%c0_21, %c0_22], %29 {strides = array<i32>} : memref<2x32xf32, #tpu.memory_space<vmem>>, vector<2x32xf32>,
    } else {
    }
    return
  }
  func.func @transform_0(%arg0: i32, %arg1: i32) -> (i32, i32) {
    %c0_i32 = arith.constant 0 : i32
    return %arg0, %arg1 : i32, i32
  }
  func.func @transform_1(%arg0: i32, %arg1: i32) -> (i32, i32, i32) {
    %c0_i32 = arith.constant 0 : i32
    %c0_i32_0 = arith.constant 0 : i32
    return %arg0, %arg1, %c0_i32 : i32, i32, i32
  }
  func.func @transform_2(%arg0: i32, %arg1: i32) -> (i32, i32) {
    %c0_i32 = arith.constant 0 : i32
    %c0_i32_0 = arith.constant 0 : i32
    return %arg0, %c0_i32 : i32, i32
  }
}

</mosaic_0001>

<llo_original>
// kernel: tpu_custom_call.1
$region0: #{tpu_custom_call.1}
  #allocation0 [shape = 'u32[]', space=smem, size = 0x4, offset = 0x4, fixed_abs, tag = 'smem constant byte address 0x4 - core index']
  #allocation1 [shape = 'u32[144,128]{1,0:T(1,128)}', space=vmem, size = 0x12000, scoped, tag = 'internal scratch']
  #allocation2 [shape = 'f32[2,32]{1,0:T(2,128)}', space=vmem, size = 0x400, scoped, tag = 'scratch operand']
  #allocation3 [shape = 'f32[2,1]{1,0:T(2,128)}', space=vmem, size = 0x400, scoped, tag = 'scratch operand']
  %s0 = inlined_call_operand.hbm [shape: s32[2,8], index: 0, kind: input, shape index: {}]
  %s1 = inlined_call_operand.hbm [shape: f32[2,8,32], index: 1, kind: input, shape index: {}]
  %s2 = inlined_call_operand.hbm [shape: f32[2,32], index: 2, kind: output, shape index: {}]
  %s3 = sld [smem:[#allocation0]]
  $region34: #{tpu_custom_call.1} parent=0
    _
  %s5 = ssub.s32 1, %s3
  %s6 = scalar_select 0, %s5, %s3
  $region1: #{tpu_custom_call.1} parent=0
    #allocation4 [shape = 'u8[1024]{0}', space=vmem, size = 0x400, scoped, tag = 'input window, operand 0, single buffered']
    #allocation5 [shape = 's32[1]{0}', space=sflag, size = 0x4, scoped, tag = 'scoped memory for tpu_custom_call.1']
    #allocation6 [shape = 's32[1]{0}', space=sflag, size = 0x4, scoped, tag = 'scoped memory for tpu_custom_call.1']
    #allocation7 [shape = 'u8[8192]{0}', space=vmem, size = 0x2000, scoped, tag = 'input window, operand 1, single buffered']
    #allocation8 [shape = 's32[1]{0}', space=sflag, size = 0x4, scoped, tag = 'scoped memory for tpu_custom_call.1']
    #allocation9 [shape = 'u8[1024]{0}', space=vmem, size = 0x400, scoped, tag = 'output window, operand 0, single buffered']
    %7 = vsyncpa [#allocation5], 0
    %8 = vsyncpa [#allocation8], 0
    %9 = vsyncpa [#allocation6], 0
    // Predicated region
    $region2: #{tpu_custom_call.1} parent=1 // pred_check
      _
    $region3: #{tpu_custom_call.1} parent=1 // pred_check_branch
      %11 = sbr.rel (0) target = $region5
    $region4: #{tpu_custom_call.1} parent=1 // pred_region
      %s13 = ssub.s32 32, 32
      %14 = vsyncadd [#allocation5], %s13
      %s16 = sshll.u32 [#allocation4], 4
      %s17 = int_to_ptr.vmem [resolvable:$true] %s16
      %19 = dma.hbm_to_vmem [thread:$0]  %s0, 32, %s17, [#allocation5]
    $region5: #{tpu_custom_call.1} parent=1 // pred_fallthru
      _
    // Predicated region
    $region6: #{tpu_custom_call.1} parent=1 // pred_check
      _
    $region7: #{tpu_custom_call.1} parent=1 // pred_check_branch
      %21 = sbr.rel (0) target = $region9
    $region8: #{tpu_custom_call.1} parent=1 // pred_region
      %s23 = ssub.s32 256, 256
      %24 = vsyncadd [#allocation8], %s23
      %s25 = sshll.u32 [#allocation7], 4
      %s26 = int_to_ptr.vmem [resolvable:$true] %s25
      %31 = dma.hbm_to_vmem [thread:$0]  %s1, 256, %s26, [#allocation8], 128, 128, 8
    $region9: #{tpu_custom_call.1} parent=1 // pred_fallthru
      _
    // Predicated region
    $region10: #{tpu_custom_call.1} parent=1 // pred_check
      _
    $region11: #{tpu_custom_call.1} parent=1 // pred_check_branch
      %33 = sbr.rel (0) target = $region13
    $region12: #{tpu_custom_call.1} parent=1 // pred_region
      %34 = dma.done [#allocation5], 32
    $region13: #{tpu_custom_call.1} parent=1 // pred_fallthru
      _
    // Predicated region
    $region14: #{tpu_custom_call.1} parent=1 // pred_check
      _
    $region15: #{tpu_custom_call.1} parent=1 // pred_check_branch
      %36 = sbr.rel (0) target = $region17
    $region16: #{tpu_custom_call.1} parent=1 // pred_region
      %37 = dma.done [#allocation8], 256
    $region17: #{tpu_custom_call.1} parent=1 // pred_fallthru
      _
    %p38 = scmp.eq.s32.totalorder 0, 0
    // Predicated region
    $region18: #{tpu_custom_call.1} parent=1 // pred_check
      %p39 = pneg %p38
    $region19: #{tpu_custom_call.1} parent=1 // pred_check_branch
      %41 = sbr.rel (%p39) target = $region21
    $region20: #{tpu_custom_call.1} parent=1 // pred_region
      %vm42 = vcmask 254976
      %43 = vst.msk [vmem:[#allocation2] sm:$0x3] %vm42, 0.0
      %vm44 = vcmask 1024
      %45 = vst.msk [vmem:[#allocation3] sm:$0x3] %vm44, 0.0
    $region21: #{tpu_custom_call.1} parent=1 // pred_fallthru
      _
    %v46 = vld [vmem:[#allocation4] sm:$0x3]
    %v47 = vld [vmem:[#allocation7] sm:$0xff]
    %v48 = vld [vmem:[#allocation7 + $0x8] sm:$0xff]
    %vm49 = vcmp.eq.s32.totalorder %v46, 1
    %v50 = vsel %vm49, 1, 0
    %v51 = vcvt.s32.f32 %v50
    %v52 = vsub.f32 1.0, %v51
    %v55 = vunpack.c.l.s4 1966171168
    %v56 = vunpack.c.0.s8 %v55
    %v57 = vlaneseq
    %v58 = vshrl.u32 %v57, 7
    %v59 = vsub.s32 %v56, %v58
    %v60 = vrot.slane %v52, %v59
    %v61 = vcombine.high %v60, %v60
    %v63 = vunpack.c.l.s4 1966171168
    %v64 = vunpack.c.0.s8 %v63
    %v65 = vlaneseq
    %v66 = vshrl.u32 %v65, 7
    %v67 = vsub.s32 %v64, %v66
    %v68 = vrot.slane %v60, %v67
    %v70 = vunpack.c.l.s4 1966171168
    %v71 = vunpack.c.0.s8 %v70
    %v72 = vlaneseq
    %v73 = vshrl.u32 %v72, 7
    %v74 = vsub.s32 %v71, %v73
    %v75 = vrot.slane %v61, %v74
    %vm76 = vcmask 64512
    %v77 = vsel %vm76, %v68, 0
    %79 = vmatprep.subr.mxu0 0.0
    %80 = vmatpush1.msra.mxu0 0.0
    %81 = vmatprep.subr.mxu0 0.0
    %82 = vmatpush1.msra.mxu0 0.0
    %83 = vmatprep.subr.mxu0 0.0
    %84 = vmatpush1.msra.mxu0 0.0
    %85 = vmatprep.subr.mxu0 0.0
    %86 = vmatpush1.msra.mxu0 0.0
    %87 = vmatprep.subr.mxu0 0.0
    %88 = vmatpush1.msra.mxu0 0.0
    %89 = vmatprep.subr.mxu0 0.0
    %90 = vmatpush1.msra.mxu0 0.0
    %91 = vmatprep.subr.mxu0 0.0
    %92 = vmatpush1.msra.mxu0 0.0
    %93 = vmatprep.subr.mxu0 0.0
    %94 = vmatpush1.msra.mxu0 0.0
    %95 = vmatprep.subr.mxu0 0.0
    %96 = vmatpush1.msra.mxu0 0.0
    %97 = vmatprep.subr.mxu0 0.0
    %98 = vmatpush1.msra.mxu0 0.0
    %99 = vmatprep.subr.mxu0 0.0
    %100 = vmatpush1.msra.mxu0 0.0
    %101 = vmatprep.subr.mxu0 0.0
    %102 = vmatpush1.msra.mxu0 0.0
    %103 = vmatprep.subr.mxu0 0.0
    %104 = vmatpush1.msra.mxu0 0.0
    %105 = vmatprep.subr.mxu0 0.0
    %106 = vmatpush1.msra.mxu0 0.0
    %107 = vmatprep.subr.mxu0 0.0
    %108 = vmatpush1.msra.mxu0 0.0
    %109 = vmatprep.subr.mxu0 0.0
    %v110 = vand.u32 %v47, 4294901760
    %111 = vmatpush1.msra.mxu0 %v110
    %112 = vmatprep.subr.mxu0 0.0
    %113 = vmatpush2.msra.mxu0 0.0
    %114 = vmatprep.subr.mxu0 0.0
    %115 = vmatpush2.msra.mxu0 0.0
    %116 = vmatprep.subr.mxu0 0.0
    %117 = vmatpush2.msra.mxu0 0.0
    %118 = vmatprep.subr.mxu0 0.0
    %119 = vmatpush2.msra.mxu0 0.0
    %120 = vmatprep.subr.mxu0 0.0
    %121 = vmatpush2.msra.mxu0 0.0
    %122 = vmatprep.subr.mxu0 0.0
    %123 = vmatpush2.msra.mxu0 0.0
    %124 = vmatprep.subr.mxu0 0.0
    %125 = vmatpush2.msra.mxu0 0.0
    %126 = vmatprep.subr.mxu0 0.0
    %127 = vmatpush2.msra.mxu0 0.0
    %128 = vmatprep.subr.mxu0 0.0
    %129 = vmatpush2.msra.mxu0 0.0
    %130 = vmatprep.subr.mxu0 0.0
    %131 = vmatpush2.msra.mxu0 0.0
    %132 = vmatprep.subr.mxu0 0.0
    %133 = vmatpush2.msra.mxu0 0.0
    %134 = vmatprep.subr.mxu0 0.0
    %135 = vmatpush2.msra.mxu0 0.0
    %136 = vmatprep.subr.mxu0 0.0
    %137 = vmatpush2.msra.mxu0 0.0
    %138 = vmatprep.subr.mxu0 0.0
    %139 = vmatpush2.msra.mxu0 0.0
    %140 = vmatprep.subr.mxu0 0.0
    %141 = vmatpush2.msra.mxu0 0.0
    %142 = vmatprep.subr.mxu0 0.0
    %143 = vmatpush2.msra.mxu0 0.0
    %144 = vmatprep.mubr.f32.mxu0 0.0
    %v145 = vand.u32 %v77, 4294901760
    %v146 = vsub.f32 %v77, %v145
    %v147 = vand.u32 %v146, 4294901760
    %v148 = vsub.f32 %v146, %v147
    %v149 = vand.u32 %v148, 4294901760
    %150 = vmatmul.mubr.f32.gmra.mxu0 %v149
    %v151 = vpop.f32.mrf.mxu0
    %v152 = vadd.f32 0.0, %v151
    %v153 = vpop.f32.mrf.mxu0
    %154 = vdwg.mxu0
    %155 = vmatprep.subr.mxu0 0.0
    %156 = vmatpush1.msra.mxu0 0.0
    %157 = vmatprep.subr.mxu0 0.0
    %158 = vmatpush1.msra.mxu0 0.0
    %159 = vmatprep.subr.mxu0 0.0
    %160 = vmatpush1.msra.mxu0 0.0
    %161 = vmatprep.subr.mxu0 0.0
    %162 = vmatpush1.msra.mxu0 0.0
    %163 = vmatprep.subr.mxu0 0.0
    %164 = vmatpush1.msra.mxu0 0.0
    %165 = vmatprep.subr.mxu0 0.0
    %166 = vmatpush1.msra.mxu0 0.0
    %167 = vmatprep.subr.mxu0 0.0
    %168 = vmatpush1.msra.mxu0 0.0
    %169 = vmatprep.subr.mxu0 0.0
    %170 = vmatpush1.msra.mxu0 0.0
    %171 = vmatprep.subr.mxu0 0.0
    %172 = vmatpush1.msra.mxu0 0.0
    %173 = vmatprep.subr.mxu0 0.0
    %174 = vmatpush1.msra.mxu0 0.0
    %175 = vmatprep.subr.mxu0 0.0
    %176 = vmatpush1.msra.mxu0 0.0
    %177 = vmatprep.subr.mxu0 0.0
    %178 = vmatpush1.msra.mxu0 0.0
    %179 = vmatprep.subr.mxu0 0.0
    %180 = vmatpush1.msra.mxu0 0.0
    %181 = vmatprep.subr.mxu0 0.0
    %182 = vmatpush1.msra.mxu0 0.0
    %183 = vmatprep.subr.mxu0 0.0
    %184 = vmatpush1.msra.mxu0 0.0
    %185 = vmatprep.subr.mxu0 0.0
    %v186 = vand.u32 %v47, 4294901760
    %v187 = vsub.f32 %v47, %v186
    %v188 = vand.u32 %v187, 4294901760
    %v189 = vsub.f32 %v187, %v188
    %v190 = vand.u32 %v189, 4294901760
    %191 = vmatpush1.msra.mxu0 %v190
    %192 = vmatprep.subr.mxu0 0.0
    %193 = vmatpush2.msra.mxu0 0.0
    %194 = vmatprep.subr.mxu0 0.0
    %195 = vmatpush2.msra.mxu0 0.0
    %196 = vmatprep.subr.mxu0 0.0
    %197 = vmatpush2.msra.mxu0 0.0
    %198 = vmatprep.subr.mxu0 0.0
    %199 = vmatpush2.msra.mxu0 0.0
    %200 = vmatprep.subr.mxu0 0.0
    %201 = vmatpush2.msra.mxu0 0.0
    %202 = vmatprep.subr.mxu0 0.0
    %203 = vmatpush2.msra.mxu0 0.0
    %204 = vmatprep.subr.mxu0 0.0
    %205 = vmatpush2.msra.mxu0 0.0
    %206 = vmatprep.subr.mxu0 0.0
    %207 = vmatpush2.msra.mxu0 0.0
    %208 = vmatprep.subr.mxu0 0.0
    %209 = vmatpush2.msra.mxu0 0.0
    %210 = vmatprep.subr.mxu0 0.0
    %211 = vmatpush2.msra.mxu0 0.0
    %212 = vmatprep.subr.mxu0 0.0
    %213 = vmatpush2.msra.mxu0 0.0
    %214 = vmatprep.subr.mxu0 0.0
    %215 = vmatpush2.msra.mxu0 0.0
    %216 = vmatprep.subr.mxu0 0.0
    %217 = vmatpush2.msra.mxu0 0.0
    %218 = vmatprep.subr.mxu0 0.0
    %219 = vmatpush2.msra.mxu0 0.0
    %220 = vmatprep.subr.mxu0 0.0
    %221 = vmatpush2.msra.mxu0 0.0
    %222 = vmatprep.subr.mxu0 0.0
    %223 = vmatpush2.msra.mxu0 0.0
    %224 = vmatprep.mubr.f32.mxu0 0.0
    %v225 = vand.u32 %v77, 4294901760
    %226 = vmatmul.mubr.f32.gmra.mxu0 %v225
    %v227 = vpop.f32.mrf.mxu0
    %v228 = vadd.f32 %v152, %v227
    %v229 = vpop.f32.mrf.mxu0
    %230 = vdwg.mxu0
    %231 = vmatprep.subr.mxu0 0.0
    %232 = vmatpush1.msra.mxu0 0.0
    %233 = vmatprep.subr.mxu0 0.0
    %234 = vmatpush1.msra.mxu0 0.0
    %235 = vmatprep.subr.mxu0 0.0
    %236 = vmatpush1.msra.mxu0 0.0
    %237 = vmatprep.subr.mxu0 0.0
    %238 = vmatpush1.msra.mxu0 0.0
    %239 = vmatprep.subr.mxu0 0.0
    %240 = vmatpush1.msra.mxu0 0.0
    %241 = vmatprep.subr.mxu0 0.0
    %242 = vmatpush1.msra.mxu0 0.0
    %243 = vmatprep.subr.mxu0 0.0
    %244 = vmatpush1.msra.mxu0 0.0
    %245 = vmatprep.subr.mxu0 0.0
    %246 = vmatpush1.msra.mxu0 0.0
    %247 = vmatprep.subr.mxu0 0.0
    %248 = vmatpush1.msra.mxu0 0.0
    %249 = vmatprep.subr.mxu0 0.0
    %250 = vmatpush1.msra.mxu0 0.0
    %251 = vmatprep.subr.mxu0 0.0
    %252 = vmatpush1.msra.mxu0 0.0
    %253 = vmatprep.subr.mxu0 0.0
    %254 = vmatpush1.msra.mxu0 0.0
    %255 = vmatprep.subr.mxu0 0.0
    %256 = vmatpush1.msra.mxu0 0.0
    %257 = vmatprep.subr.mxu0 0.0
    %258 = vmatpush1.msra.mxu0 0.0
    %259 = vmatprep.subr.mxu0 0.0
    %260 = vmatpush1.msra.mxu0 0.0
    %261 = vmatprep.subr.mxu0 0.0
    %v262 = vand.u32 %v47, 4294901760
    %v263 = vsub.f32 %v47, %v262
    %264 = vmatpush1.msra.mxu0 %v263
    %265 = vmatprep.subr.mxu0 0.0
    %266 = vmatpush2.msra.mxu0 0.0
    %267 = vmatprep.subr.mxu0 0.0
    %268 = vmatpush2.msra.mxu0 0.0
    %269 = vmatprep.subr.mxu0 0.0
    %270 = vmatpush2.msra.mxu0 0.0
    %271 = vmatprep.subr.mxu0 0.0
    %272 = vmatpush2.msra.mxu0 0.0
    %273 = vmatprep.subr.mxu0 0.0
    %274 = vmatpush2.msra.mxu0 0.0
    %275 = vmatprep.subr.mxu0 0.0
    %276 = vmatpush2.msra.mxu0 0.0
    %277 = vmatprep.subr.mxu0 0.0
    %278 = vmatpush2.msra.mxu0 0.0
    %279 = vmatprep.subr.mxu0 0.0
    %280 = vmatpush2.msra.mxu0 0.0
    %281 = vmatprep.subr.mxu0 0.0
    %282 = vmatpush2.msra.mxu0 0.0
    %283 = vmatprep.subr.mxu0 0.0
    %284 = vmatpush2.msra.mxu0 0.0
    %285 = vmatprep.subr.mxu0 0.0
    %286 = vmatpush2.msra.mxu0 0.0
    %287 = vmatprep.subr.mxu0 0.0
    %288 = vmatpush2.msra.mxu0 0.0
    %289 = vmatprep.subr.mxu0 0.0
    %290 = vmatpush2.msra.mxu0 0.0
    %291 = vmatprep.subr.mxu0 0.0
    %292 = vmatpush2.msra.mxu0 0.0
    %293 = vmatprep.subr.mxu0 0.0
    %294 = vmatpush2.msra.mxu0 0.0
    %295 = vmatprep.subr.mxu0 0.0
    %296 = vmatpush2.msra.mxu0 0.0
    %297 = vmatprep.mubr.f32.mxu0 0.0
    %v298 = vand.u32 %v77, 4294901760
    %v299 = vsub.f32 %v77, %v298
    %300 = vmatmul.mubr.f32.gmra.mxu0 %v299
    %v301 = vpop.f32.mrf.mxu0
    %v302 = vadd.f32 %v228, %v301
    %v303 = vpop.f32.mrf.mxu0
    %304 = vdwg.mxu0
    %305 = vmatprep.subr.mxu0 0.0
    %306 = vmatpush1.msra.mxu0 0.0
    %307 = vmatprep.subr.mxu0 0.0
    %308 = vmatpush1.msra.mxu0 0.0
    %309 = vmatprep.subr.mxu0 0.0
    %310 = vmatpush1.msra.mxu0 0.0
    %311 = vmatprep.subr.mxu0 0.0
    %312 = vmatpush1.msra.mxu0 0.0
    %313 = vmatprep.subr.mxu0 0.0
    %314 = vmatpush1.msra.mxu0 0.0
    %315 = vmatprep.subr.mxu0 0.0
    %316 = vmatpush1.msra.mxu0 0.0
    %317 = vmatprep.subr.mxu0 0.0
    %318 = vmatpush1.msra.mxu0 0.0
    %319 = vmatprep.subr.mxu0 0.0
    %320 = vmatpush1.msra.mxu0 0.0
    %321 = vmatprep.subr.mxu0 0.0
    %322 = vmatpush1.msra.mxu0 0.0
    %323 = vmatprep.subr.mxu0 0.0
    %324 = vmatpush1.msra.mxu0 0.0
    %325 = vmatprep.subr.mxu0 0.0
    %326 = vmatpush1.msra.mxu0 0.0
    %327 = vmatprep.subr.mxu0 0.0
    %328 = vmatpush1.msra.mxu0 0.0
    %329 = vmatprep.subr.mxu0 0.0
    %330 = vmatpush1.msra.mxu0 0.0
    %331 = vmatprep.subr.mxu0 0.0
    %332 = vmatpush1.msra.mxu0 0.0
    %333 = vmatprep.subr.mxu0 0.0
    %334 = vmatpush1.msra.mxu0 0.0
    %335 = vmatprep.subr.mxu0 0.0
    %v336 = vand.u32 %v47, 4294901760
    %337 = vmatpush1.msra.mxu0 %v336
    %338 = vmatprep.subr.mxu0 0.0
    %339 = vmatpush2.msra.mxu0 0.0
    %340 = vmatprep.subr.mxu0 0.0
    %341 = vmatpush2.msra.mxu0 0.0
    %342 = vmatprep.subr.mxu0 0.0
    %343 = vmatpush2.msra.mxu0 0.0
    %344 = vmatprep.subr.mxu0 0.0
    %345 = vmatpush2.msra.mxu0 0.0
    %346 = vmatprep.subr.mxu0 0.0
    %347 = vmatpush2.msra.mxu0 0.0
    %348 = vmatprep.subr.mxu0 0.0
    %349 = vmatpush2.msra.mxu0 0.0
    %350 = vmatprep.subr.mxu0 0.0
    %351 = vmatpush2.msra.mxu0 0.0
    %352 = vmatprep.subr.mxu0 0.0
    %353 = vmatpush2.msra.mxu0 0.0
    %354 = vmatprep.subr.mxu0 0.0
    %355 = vmatpush2.msra.mxu0 0.0
    %356 = vmatprep.subr.mxu0 0.0
    %357 = vmatpush2.msra.mxu0 0.0
    %358 = vmatprep.subr.mxu0 0.0
    %359 = vmatpush2.msra.mxu0 0.0
    %360 = vmatprep.subr.mxu0 0.0
    %361 = vmatpush2.msra.mxu0 0.0
    %362 = vmatprep.subr.mxu0 0.0
    %363 = vmatpush2.msra.mxu0 0.0
    %364 = vmatprep.subr.mxu0 0.0
    %365 = vmatpush2.msra.mxu0 0.0
    %366 = vmatprep.subr.mxu0 0.0
    %367 = vmatpush2.msra.mxu0 0.0
    %368 = vmatprep.subr.mxu0 0.0
    %369 = vmatpush2.msra.mxu0 0.0
    %370 = vmatprep.mubr.f32.mxu0 0.0
    %v371 = vand.u32 %v77, 4294901760
    %v372 = vsub.f32 %v77, %v371
    %v373 = vand.u32 %v372, 4294901760
    %374 = vmatmul.mubr.f32.gmra.mxu0 %v373
    %v375 = vpop.f32.mrf.mxu0
    %v376 = vadd.f32 %v302, %v375
    %v377 = vpop.f32.mrf.mxu0
    %378 = vdwg.mxu0
    %379 = vmatprep.subr.mxu0 0.0
    %380 = vmatpush1.msra.mxu0 0.0
    %381 = vmatprep.subr.mxu0 0.0
    %382 = vmatpush1.msra.mxu0 0.0
    %383 = vmatprep.subr.mxu0 0.0
    %384 = vmatpush1.msra.mxu0 0.0
    %385 = vmatprep.subr.mxu0 0.0
    %386 = vmatpush1.msra.mxu0 0.0
    %387 = vmatprep.subr.mxu0 0.0
    %388 = vmatpush1.msra.mxu0 0.0
    %389 = vmatprep.subr.mxu0 0.0
    %390 = vmatpush1.msra.mxu0 0.0
    %391 = vmatprep.subr.mxu0 0.0
    %392 = vmatpush1.msra.mxu0 0.0
    %393 = vmatprep.subr.mxu0 0.0
    %394 = vmatpush1.msra.mxu0 0.0
    %395 = vmatprep.subr.mxu0 0.0
    %396 = vmatpush1.msra.mxu0 0.0
    %397 = vmatprep.subr.mxu0 0.0
    %398 = vmatpush1.msra.mxu0 0.0
    %399 = vmatprep.subr.mxu0 0.0
    %400 = vmatpush1.msra.mxu0 0.0
    %401 = vmatprep.subr.mxu0 0.0
    %402 = vmatpush1.msra.mxu0 0.0
    %403 = vmatprep.subr.mxu0 0.0
    %404 = vmatpush1.msra.mxu0 0.0
    %405 = vmatprep.subr.mxu0 0.0
    %406 = vmatpush1.msra.mxu0 0.0
    %407 = vmatprep.subr.mxu0 0.0
    %408 = vmatpush1.msra.mxu0 0.0
    %409 = vmatprep.subr.mxu0 0.0
    %v410 = vand.u32 %v47, 4294901760
    %v411 = vsub.f32 %v47, %v410
    %v412 = vand.u32 %v411, 4294901760
    %413 = vmatpush1.msra.mxu0 %v412
    %414 = vmatprep.subr.mxu0 0.0
    %415 = vmatpush2.msra.mxu0 0.0
    %416 = vmatprep.subr.mxu0 0.0
    %417 = vmatpush2.msra.mxu0 0.0
    %418 = vmatprep.subr.mxu0 0.0
    %419 = vmatpush2.msra.mxu0 0.0
    %420 = vmatprep.subr.mxu0 0.0
    %421 = vmatpush2.msra.mxu0 0.0
    %422 = vmatprep.subr.mxu0 0.0
    %423 = vmatpush2.msra.mxu0 0.0
    %424 = vmatprep.subr.mxu0 0.0
    %425 = vmatpush2.msra.mxu0 0.0
    %426 = vmatprep.subr.mxu0 0.0
    %427 = vmatpush2.msra.mxu0 0.0
    %428 = vmatprep.subr.mxu0 0.0
    %429 = vmatpush2.msra.mxu0 0.0
    %430 = vmatprep.subr.mxu0 0.0
    %431 = vmatpush2.msra.mxu0 0.0
    %432 = vmatprep.subr.mxu0 0.0
    %433 = vmatpush2.msra.mxu0 0.0
    %434 = vmatprep.subr.mxu0 0.0
    %435 = vmatpush2.msra.mxu0 0.0
    %436 = vmatprep.subr.mxu0 0.0
    %437 = vmatpush2.msra.mxu0 0.0
    %438 = vmatprep.subr.mxu0 0.0
    %439 = vmatpush2.msra.mxu0 0.0
    %440 = vmatprep.subr.mxu0 0.0
    %441 = vmatpush2.msra.mxu0 0.0
    %442 = vmatprep.subr.mxu0 0.0
    %443 = vmatpush2.msra.mxu0 0.0
    %444 = vmatprep.subr.mxu0 0.0
    %445 = vmatpush2.msra.mxu0 0.0
    %446 = vmatprep.mubr.f32.mxu0 0.0
    %v447 = vand.u32 %v77, 4294901760
    %448 = vmatmul.mubr.f32.gmra.mxu0 %v447
    %v449 = vpop.f32.mrf.mxu0
    %v450 = vadd.f32 %v376, %v449
    %v451 = vpop.f32.mrf.mxu0
    %452 = vdwg.mxu0
    %453 = vmatprep.subr.mxu0 0.0
    %454 = vmatpush1.msra.mxu0 0.0
    %455 = vmatprep.subr.mxu0 0.0
    %456 = vmatpush1.msra.mxu0 0.0
    %457 = vmatprep.subr.mxu0 0.0
    %458 = vmatpush1.msra.mxu0 0.0
    %459 = vmatprep.subr.mxu0 0.0
    %460 = vmatpush1.msra.mxu0 0.0
    %461 = vmatprep.subr.mxu0 0.0
    %462 = vmatpush1.msra.mxu0 0.0
    %463 = vmatprep.subr.mxu0 0.0
    %464 = vmatpush1.msra.mxu0 0.0
    %465 = vmatprep.subr.mxu0 0.0
    %466 = vmatpush1.msra.mxu0 0.0
    %467 = vmatprep.subr.mxu0 0.0
    %468 = vmatpush1.msra.mxu0 0.0
    %469 = vmatprep.subr.mxu0 0.0
    %470 = vmatpush1.msra.mxu0 0.0
    %471 = vmatprep.subr.mxu0 0.0
    %472 = vmatpush1.msra.mxu0 0.0
    %473 = vmatprep.subr.mxu0 0.0
    %474 = vmatpush1.msra.mxu0 0.0
    %475 = vmatprep.subr.mxu0 0.0
    %476 = vmatpush1.msra.mxu0 0.0
    %477 = vmatprep.subr.mxu0 0.0
    %478 = vmatpush1.msra.mxu0 0.0
    %479 = vmatprep.subr.mxu0 0.0
    %480 = vmatpush1.msra.mxu0 0.0
    %481 = vmatprep.subr.mxu0 0.0
    %482 = vmatpush1.msra.mxu0 0.0
    %483 = vmatprep.subr.mxu0 0.0
    %v484 = vand.u32 %v47, 4294901760
    %485 = vmatpush1.msra.mxu0 %v484
    %486 = vmatprep.subr.mxu0 0.0
    %487 = vmatpush2.msra.mxu0 0.0
    %488 = vmatprep.subr.mxu0 0.0
    %489 = vmatpush2.msra.mxu0 0.0
    %490 = vmatprep.subr.mxu0 0.0
    %491 = vmatpush2.msra.mxu0 0.0
    %492 = vmatprep.subr.mxu0 0.0
    %493 = vmatpush2.msra.mxu0 0.0
    %494 = vmatprep.subr.mxu0 0.0
    %495 = vmatpush2.msra.mxu0 0.0
    %496 = vmatprep.subr.mxu0 0.0
    %497 = vmatpush2.msra.mxu0 0.0
    %498 = vmatprep.subr.mxu0 0.0
    %499 = vmatpush2.msra.mxu0 0.0
    %500 = vmatprep.subr.mxu0 0.0
    %501 = vmatpush2.msra.mxu0 0.0
    %502 = vmatprep.subr.mxu0 0.0
    %503 = vmatpush2.msra.mxu0 0.0
    %504 = vmatprep.subr.mxu0 0.0
    %505 = vmatpush2.msra.mxu0 0.0
    %506 = vmatprep.subr.mxu0 0.0
    %507 = vmatpush2.msra.mxu0 0.0
    %508 = vmatprep.subr.mxu0 0.0
    %509 = vmatpush2.msra.mxu0 0.0
    %510 = vmatprep.subr.mxu0 0.0
    %511 = vmatpush2.msra.mxu0 0.0
    %512 = vmatprep.subr.mxu0 0.0
    %513 = vmatpush2.msra.mxu0 0.0
    %514 = vmatprep.subr.mxu0 0.0
    %515 = vmatpush2.msra.mxu0 0.0
    %516 = vmatprep.subr.mxu0 0.0
    %517 = vmatpush2.msra.mxu0 0.0
    %518 = vmatprep.mubr.f32.mxu0 0.0
    %v519 = vand.u32 %v77, 4294901760
    %520 = vmatmul.mubr.f32.gmra.mxu0 %v519
    %v521 = vpop.f32.mrf.mxu0
    %v522 = vadd.f32 %v450, %v521
    %v523 = vpop.f32.mrf.mxu0
    %524 = vdwg.mxu0
    %v525 = vsel %vm76, %v75, 0
    %527 = vmatprep.subr.mxu0 0.0
    %528 = vmatpush1.msra.mxu0 0.0
    %529 = vmatprep.subr.mxu0 0.0
    %530 = vmatpush1.msra.mxu0 0.0
    %531 = vmatprep.subr.mxu0 0.0
    %532 = vmatpush1.msra.mxu0 0.0
    %533 = vmatprep.subr.mxu0 0.0
    %534 = vmatpush1.msra.mxu0 0.0
    %535 = vmatprep.subr.mxu0 0.0
    %536 = vmatpush1.msra.mxu0 0.0
    %537 = vmatprep.subr.mxu0 0.0
    %538 = vmatpush1.msra.mxu0 0.0
    %539 = vmatprep.subr.mxu0 0.0
    %540 = vmatpush1.msra.mxu0 0.0
    %541 = vmatprep.subr.mxu0 0.0
    %542 = vmatpush1.msra.mxu0 0.0
    %543 = vmatprep.subr.mxu0 0.0
    %544 = vmatpush1.msra.mxu0 0.0
    %545 = vmatprep.subr.mxu0 0.0
    %546 = vmatpush1.msra.mxu0 0.0
    %547 = vmatprep.subr.mxu0 0.0
    %548 = vmatpush1.msra.mxu0 0.0
    %549 = vmatprep.subr.mxu0 0.0
    %550 = vmatpush1.msra.mxu0 0.0
    %551 = vmatprep.subr.mxu0 0.0
    %552 = vmatpush1.msra.mxu0 0.0
    %553 = vmatprep.subr.mxu0 0.0
    %554 = vmatpush1.msra.mxu0 0.0
    %555 = vmatprep.subr.mxu0 0.0
    %556 = vmatpush1.msra.mxu0 0.0
    %557 = vmatprep.subr.mxu0 0.0
    %v558 = vand.u32 %v48, 4294901760
    %559 = vmatpush1.msra.mxu0 %v558
    %560 = vmatprep.subr.mxu0 0.0
    %561 = vmatpush2.msra.mxu0 0.0
    %562 = vmatprep.subr.mxu0 0.0
    %563 = vmatpush2.msra.mxu0 0.0
    %564 = vmatprep.subr.mxu0 0.0
    %565 = vmatpush2.msra.mxu0 0.0
    %566 = vmatprep.subr.mxu0 0.0
    %567 = vmatpush2.msra.mxu0 0.0
    %568 = vmatprep.subr.mxu0 0.0
    %569 = vmatpush2.msra.mxu0 0.0
    %570 = vmatprep.subr.mxu0 0.0
    %571 = vmatpush2.msra.mxu0 0.0
    %572 = vmatprep.subr.mxu0 0.0
    %573 = vmatpush2.msra.mxu0 0.0
    %574 = vmatprep.subr.mxu0 0.0
    %575 = vmatpush2.msra.mxu0 0.0
    %576 = vmatprep.subr.mxu0 0.0
    %577 = vmatpush2.msra.mxu0 0.0
    %578 = vmatprep.subr.mxu0 0.0
    %579 = vmatpush2.msra.mxu0 0.0
    %580 = vmatprep.subr.mxu0 0.0
    %581 = vmatpush2.msra.mxu0 0.0
    %582 = vmatprep.subr.mxu0 0.0
    %583 = vmatpush2.msra.mxu0 0.0
    %584 = vmatprep.subr.mxu0 0.0
    %585 = vmatpush2.msra.mxu0 0.0
    %586 = vmatprep.subr.mxu0 0.0
    %587 = vmatpush2.msra.mxu0 0.0
    %588 = vmatprep.subr.mxu0 0.0
    %589 = vmatpush2.msra.mxu0 0.0
    %590 = vmatprep.subr.mxu0 0.0
    %591 = vmatpush2.msra.mxu0 0.0
    %592 = vmatprep.mubr.f32.mxu0 0.0
    %v593 = vand.u32 %v525, 4294901760
    %v594 = vsub.f32 %v525, %v593
    %v595 = vand.u32 %v594, 4294901760
    %v596 = vsub.f32 %v594, %v595
    %v597 = vand.u32 %v596, 4294901760
    %598 = vmatmul.mubr.f32.gmra.mxu0 %v597
    %v599 = vpop.f32.mrf.mxu0
    %v600 = vadd.f32 0.0, %v599
    %v601 = vpop.f32.mrf.mxu0
    %602 = vdwg.mxu0
    %603 = vmatprep.subr.mxu0 0.0
    %604 = vmatpush1.msra.mxu0 0.0
    %605 = vmatprep.subr.mxu0 0.0
    %606 = vmatpush1.msra.mxu0 0.0
    %607 = vmatprep.subr.mxu0 0.0
    %608 = vmatpush1.msra.mxu0 0.0
    %609 = vmatprep.subr.mxu0 0.0
    %610 = vmatpush1.msra.mxu0 0.0
    %611 = vmatprep.subr.mxu0 0.0
    %612 = vmatpush1.msra.mxu0 0.0
    %613 = vmatprep.subr.mxu0 0.0
    %614 = vmatpush1.msra.mxu0 0.0
    %615 = vmatprep.subr.mxu0 0.0
    %616 = vmatpush1.msra.mxu0 0.0
    %617 = vmatprep.subr.mxu0 0.0
    %618 = vmatpush1.msra.mxu0 0.0
    %619 = vmatprep.subr.mxu0 0.0
    %620 = vmatpush1.msra.mxu0 0.0
    %621 = vmatprep.subr.mxu0 0.0
    %622 = vmatpush1.msra.mxu0 0.0
    %623 = vmatprep.subr.mxu0 0.0
    %624 = vmatpush1.msra.mxu0 0.0
    %625 = vmatprep.subr.mxu0 0.0
    %626 = vmatpush1.msra.mxu0 0.0
    %627 = vmatprep.subr.mxu0 0.0
    %628 = vmatpush1.msra.mxu0 0.0
    %629 = vmatprep.subr.mxu0 0.0
    %630 = vmatpush1.msra.mxu0 0.0
    %631 = vmatprep.subr.mxu0 0.0
    %632 = vmatpush1.msra.mxu0 0.0
    %633 = vmatprep.subr.mxu0 0.0
    %v634 = vand.u32 %v48, 4294901760
    %v635 = vsub.f32 %v48, %v634
    %v636 = vand.u32 %v635, 4294901760
    %v637 = vsub.f32 %v635, %v636
    %v638 = vand.u32 %v637, 4294901760
    %639 = vmatpush1.msra.mxu0 %v638
    %640 = vmatprep.subr.mxu0 0.0
    %641 = vmatpush2.msra.mxu0 0.0
    %642 = vmatprep.subr.mxu0 0.0
    %643 = vmatpush2.msra.mxu0 0.0
    %644 = vmatprep.subr.mxu0 0.0
    %645 = vmatpush2.msra.mxu0 0.0
    %646 = vmatprep.subr.mxu0 0.0
    %647 = vmatpush2.msra.mxu0 0.0
    %648 = vmatprep.subr.mxu0 0.0
    %649 = vmatpush2.msra.mxu0 0.0
    %650 = vmatprep.subr.mxu0 0.0
    %651 = vmatpush2.msra.mxu0 0.0
    %652 = vmatprep.subr.mxu0 0.0
    %653 = vmatpush2.msra.mxu0 0.0
    %654 = vmatprep.subr.mxu0 0.0
    %655 = vmatpush2.msra.mxu0 0.0
    %656 = vmatprep.subr.mxu0 0.0
    %657 = vmatpush2.msra.mxu0 0.0
    %658 = vmatprep.subr.mxu0 0.0
    %659 = vmatpush2.msra.mxu0 0.0
    %660 = vmatprep.subr.mxu0 0.0
    %661 = vmatpush2.msra.mxu0 0.0
    %662 = vmatprep.subr.mxu0 0.0
    %663 = vmatpush2.msra.mxu0 0.0
    %664 = vmatprep.subr.mxu0 0.0
    %665 = vmatpush2.msra.mxu0 0.0
    %666 = vmatprep.subr.mxu0 0.0
    %667 = vmatpush2.msra.mxu0 0.0
    %668 = vmatprep.subr.mxu0 0.0
    %669 = vmatpush2.msra.mxu0 0.0
    %670 = vmatprep.subr.mxu0 0.0
    %671 = vmatpush2.msra.mxu0 0.0
    %672 = vmatprep.mubr.f32.mxu0 0.0
    %v673 = vand.u32 %v525, 4294901760
    %674 = vmatmul.mubr.f32.gmra.mxu0 %v673
    %v675 = vpop.f32.mrf.mxu0
    %v676 = vadd.f32 %v600, %v675
    %v677 = vpop.f32.mrf.mxu0
    %678 = vdwg.mxu0
    %679 = vmatprep.subr.mxu0 0.0
    %680 = vmatpush1.msra.mxu0 0.0
    %681 = vmatprep.subr.mxu0 0.0
    %682 = vmatpush1.msra.mxu0 0.0
    %683 = vmatprep.subr.mxu0 0.0
    %684 = vmatpush1.msra.mxu0 0.0
    %685 = vmatprep.subr.mxu0 0.0
    %686 = vmatpush1.msra.mxu0 0.0
    %687 = vmatprep.subr.mxu0 0.0
    %688 = vmatpush1.msra.mxu0 0.0
    %689 = vmatprep.subr.mxu0 0.0
    %690 = vmatpush1.msra.mxu0 0.0
    %691 = vmatprep.subr.mxu0 0.0
    %692 = vmatpush1.msra.mxu0 0.0
    %693 = vmatprep.subr.mxu0 0.0
    %694 = vmatpush1.msra.mxu0 0.0
    %695 = vmatprep.subr.mxu0 0.0
    %696 = vmatpush1.msra.mxu0 0.0
    %697 = vmatprep.subr.mxu0 0.0
    %698 = vmatpush1.msra.mxu0 0.0
    %699 = vmatprep.subr.mxu0 0.0
    %700 = vmatpush1.msra.mxu0 0.0
    %701 = vmatprep.subr.mxu0 0.0
    %702 = vmatpush1.msra.mxu0 0.0
    %703 = vmatprep.subr.mxu0 0.0
    %704 = vmatpush1.msra.mxu0 0.0
    %705 = vmatprep.subr.mxu0 0.0
    %706 = vmatpush1.msra.mxu0 0.0
    %707 = vmatprep.subr.mxu0 0.0
    %708 = vmatpush1.msra.mxu0 0.0
    %709 = vmatprep.subr.mxu0 0.0
    %v710 = vand.u32 %v48, 4294901760
    %v711 = vsub.f32 %v48, %v710
    %712 = vmatpush1.msra.mxu0 %v711
    %713 = vmatprep.subr.mxu0 0.0
    %714 = vmatpush2.msra.mxu0 0.0
    %715 = vmatprep.subr.mxu0 0.0
    %716 = vmatpush2.msra.mxu0 0.0
    %717 = vmatprep.subr.mxu0 0.0
    %718 = vmatpush2.msra.mxu0 0.0
    %719 = vmatprep.subr.mxu0 0.0
    %720 = vmatpush2.msra.mxu0 0.0
    %721 = vmatprep.subr.mxu0 0.0
    %722 = vmatpush2.msra.mxu0 0.0
    %723 = vmatprep.subr.mxu0 0.0
    %724 = vmatpush2.msra.mxu0 0.0
    %725 = vmatprep.subr.mxu0 0.0
    %726 = vmatpush2.msra.mxu0 0.0
    %727 = vmatprep.subr.mxu0 0.0
    %728 = vmatpush2.msra.mxu0 0.0
    %729 = vmatprep.subr.mxu0 0.0
    %730 = vmatpush2.msra.mxu0 0.0
    %731 = vmatprep.subr.mxu0 0.0
    %732 = vmatpush2.msra.mxu0 0.0
    %733 = vmatprep.subr.mxu0 0.0
    %734 = vmatpush2.msra.mxu0 0.0
    %735 = vmatprep.subr.mxu0 0.0
    %736 = vmatpush2.msra.mxu0 0.0
    %737 = vmatprep.subr.mxu0 0.0
    %738 = vmatpush2.msra.mxu0 0.0
    %739 = vmatprep.subr.mxu0 0.0
    %740 = vmatpush2.msra.mxu0 0.0
    %741 = vmatprep.subr.mxu0 0.0
    %742 = vmatpush2.msra.mxu0 0.0
    %743 = vmatprep.subr.mxu0 0.0
    %744 = vmatpush2.msra.mxu0 0.0
    %745 = vmatprep.mubr.f32.mxu0 0.0
    %v746 = vand.u32 %v525, 4294901760
    %v747 = vsub.f32 %v525, %v746
    %748 = vmatmul.mubr.f32.gmra.mxu0 %v747
    %v749 = vpop.f32.mrf.mxu0
    %v750 = vadd.f32 %v676, %v749
    %v751 = vpop.f32.mrf.mxu0
    %752 = vdwg.mxu0
    %753 = vmatprep.subr.mxu0 0.0
    %754 = vmatpush1.msra.mxu0 0.0
    %755 = vmatprep.subr.mxu0 0.0
    %756 = vmatpush1.msra.mxu0 0.0
    %757 = vmatprep.subr.mxu0 0.0
    %758 = vmatpush1.msra.mxu0 0.0
    %759 = vmatprep.subr.mxu0 0.0
    %760 = vmatpush1.msra.mxu0 0.0
    %761 = vmatprep.subr.mxu0 0.0
    %762 = vmatpush1.msra.mxu0 0.0
    %763 = vmatprep.subr.mxu0 0.0
    %764 = vmatpush1.msra.mxu0 0.0
    %765 = vmatprep.subr.mxu0 0.0
    %766 = vmatpush1.msra.mxu0 0.0
    %767 = vmatprep.subr.mxu0 0.0
    %768 = vmatpush1.msra.mxu0 0.0
    %769 = vmatprep.subr.mxu0 0.0
    %770 = vmatpush1.msra.mxu0 0.0
    %771 = vmatprep.subr.mxu0 0.0
    %772 = vmatpush1.msra.mxu0 0.0
    %773 = vmatprep.subr.mxu0 0.0
    %774 = vmatpush1.msra.mxu0 0.0
    %775 = vmatprep.subr.mxu0 0.0
    %776 = vmatpush1.msra.mxu0 0.0
    %777 = vmatprep.subr.mxu0 0.0
    %778 = vmatpush1.msra.mxu0 0.0
    %779 = vmatprep.subr.mxu0 0.0
    %780 = vmatpush1.msra.mxu0 0.0
    %781 = vmatprep.subr.mxu0 0.0
    %782 = vmatpush1.msra.mxu0 0.0
    %783 = vmatprep.subr.mxu0 0.0
    %v784 = vand.u32 %v48, 4294901760
    %785 = vmatpush1.msra.mxu0 %v784
    %786 = vmatprep.subr.mxu0 0.0
    %787 = vmatpush2.msra.mxu0 0.0
    %788 = vmatprep.subr.mxu0 0.0
    %789 = vmatpush2.msra.mxu0 0.0
    %790 = vmatprep.subr.mxu0 0.0
    %791 = vmatpush2.msra.mxu0 0.0
    %792 = vmatprep.subr.mxu0 0.0
    %793 = vmatpush2.msra.mxu0 0.0
    %794 = vmatprep.subr.mxu0 0.0
    %795 = vmatpush2.msra.mxu0 0.0
    %796 = vmatprep.subr.mxu0 0.0
    %797 = vmatpush2.msra.mxu0 0.0
    %798 = vmatprep.subr.mxu0 0.0
    %799 = vmatpush2.msra.mxu0 0.0
    %800 = vmatprep.subr.mxu0 0.0
    %801 = vmatpush2.msra.mxu0 0.0
    %802 = vmatprep.subr.mxu0 0.0
    %803 = vmatpush2.msra.mxu0 0.0
    %804 = vmatprep.subr.mxu0 0.0
    %805 = vmatpush2.msra.mxu0 0.0
    %806 = vmatprep.subr.mxu0 0.0
    %807 = vmatpush2.msra.mxu0 0.0
    %808 = vmatprep.subr.mxu0 0.0
    %809 = vmatpush2.msra.mxu0 0.0
    %810 = vmatprep.subr.mxu0 0.0
    %811 = vmatpush2.msra.mxu0 0.0
    %812 = vmatprep.subr.mxu0 0.0
    %813 = vmatpush2.msra.mxu0 0.0
    %814 = vmatprep.subr.mxu0 0.0
    %815 = vmatpush2.msra.mxu0 0.0
    %816 = vmatprep.subr.mxu0 0.0
    %817 = vmatpush2.msra.mxu0 0.0
    %818 = vmatprep.mubr.f32.mxu0 0.0
    %v819 = vand.u32 %v525, 4294901760
    %v820 = vsub.f32 %v525, %v819
    %v821 = vand.u32 %v820, 4294901760
    %822 = vmatmul.mubr.f32.gmra.mxu0 %v821
    %v823 = vpop.f32.mrf.mxu0
    %v824 = vadd.f32 %v750, %v823
    %v825 = vpop.f32.mrf.mxu0
    %826 = vdwg.mxu0
    %827 = vmatprep.subr.mxu0 0.0
    %828 = vmatpush1.msra.mxu0 0.0
    %829 = vmatprep.subr.mxu0 0.0
    %830 = vmatpush1.msra.mxu0 0.0
    %831 = vmatprep.subr.mxu0 0.0
    %832 = vmatpush1.msra.mxu0 0.0
    %833 = vmatprep.subr.mxu0 0.0
    %834 = vmatpush1.msra.mxu0 0.0
    %835 = vmatprep.subr.mxu0 0.0
    %836 = vmatpush1.msra.mxu0 0.0
    %837 = vmatprep.subr.mxu0 0.0
    %838 = vmatpush1.msra.mxu0 0.0
    %839 = vmatprep.subr.mxu0 0.0
    %840 = vmatpush1.msra.mxu0 0.0
    %841 = vmatprep.subr.mxu0 0.0
    %842 = vmatpush1.msra.mxu0 0.0
    %843 = vmatprep.subr.mxu0 0.0
    %844 = vmatpush1.msra.mxu0 0.0
    %845 = vmatprep.subr.mxu0 0.0
    %846 = vmatpush1.msra.mxu0 0.0
    %847 = vmatprep.subr.mxu0 0.0
    %848 = vmatpush1.msra.mxu0 0.0
    %849 = vmatprep.subr.mxu0 0.0
    %850 = vmatpush1.msra.mxu0 0.0
    %851 = vmatprep.subr.mxu0 0.0
    %852 = vmatpush1.msra.mxu0 0.0
    %853 = vmatprep.subr.mxu0 0.0
    %854 = vmatpush1.msra.mxu0 0.0
    %855 = vmatprep.subr.mxu0 0.0
    %856 = vmatpush1.msra.mxu0 0.0
    %857 = vmatprep.subr.mxu0 0.0
    %v858 = vand.u32 %v48, 4294901760
    %v859 = vsub.f32 %v48, %v858
    %v860 = vand.u32 %v859, 4294901760
    %861 = vmatpush1.msra.mxu0 %v860
    %862 = vmatprep.subr.mxu0 0.0
    %863 = vmatpush2.msra.mxu0 0.0
    %864 = vmatprep.subr.mxu0 0.0
    %865 = vmatpush2.msra.mxu0 0.0
    %866 = vmatprep.subr.mxu0 0.0
    %867 = vmatpush2.msra.mxu0 0.0
    %868 = vmatprep.subr.mxu0 0.0
    %869 = vmatpush2.msra.mxu0 0.0
    %870 = vmatprep.subr.mxu0 0.0
    %871 = vmatpush2.msra.mxu0 0.0
    %872 = vmatprep.subr.mxu0 0.0
    %873 = vmatpush2.msra.mxu0 0.0
    %874 = vmatprep.subr.mxu0 0.0
    %875 = vmatpush2.msra.mxu0 0.0
    %876 = vmatprep.subr.mxu0 0.0
    %877 = vmatpush2.msra.mxu0 0.0
    %878 = vmatprep.subr.mxu0 0.0
    %879 = vmatpush2.msra.mxu0 0.0
    %880 = vmatprep.subr.mxu0 0.0
    %881 = vmatpush2.msra.mxu0 0.0
    %882 = vmatprep.subr.mxu0 0.0
    %883 = vmatpush2.msra.mxu0 0.0
    %884 = vmatprep.subr.mxu0 0.0
    %885 = vmatpush2.msra.mxu0 0.0
    %886 = vmatprep.subr.mxu0 0.0
    %887 = vmatpush2.msra.mxu0 0.0
    %888 = vmatprep.subr.mxu0 0.0
    %889 = vmatpush2.msra.mxu0 0.0
    %890 = vmatprep.subr.mxu0 0.0
    %891 = vmatpush2.msra.mxu0 0.0
    %892 = vmatprep.subr.mxu0 0.0
    %893 = vmatpush2.msra.mxu0 0.0
    %894 = vmatprep.mubr.f32.mxu0 0.0
    %v895 = vand.u32 %v525, 4294901760
    %896 = vmatmul.mubr.f32.gmra.mxu0 %v895
    %v897 = vpop.f32.mrf.mxu0
    %v898 = vadd.f32 %v824, %v897
    %v899 = vpop.f32.mrf.mxu0
    %900 = vdwg.mxu0
    %901 = vmatprep.subr.mxu0 0.0
    %902 = vmatpush1.msra.mxu0 0.0
    %903 = vmatprep.subr.mxu0 0.0
    %904 = vmatpush1.msra.mxu0 0.0
    %905 = vmatprep.subr.mxu0 0.0
    %906 = vmatpush1.msra.mxu0 0.0
    %907 = vmatprep.subr.mxu0 0.0
    %908 = vmatpush1.msra.mxu0 0.0
    %909 = vmatprep.subr.mxu0 0.0
    %910 = vmatpush1.msra.mxu0 0.0
    %911 = vmatprep.subr.mxu0 0.0
    %912 = vmatpush1.msra.mxu0 0.0
    %913 = vmatprep.subr.mxu0 0.0
    %914 = vmatpush1.msra.mxu0 0.0
    %915 = vmatprep.subr.mxu0 0.0
    %916 = vmatpush1.msra.mxu0 0.0
    %917 = vmatprep.subr.mxu0 0.0
    %918 = vmatpush1.msra.mxu0 0.0
    %919 = vmatprep.subr.mxu0 0.0
    %920 = vmatpush1.msra.mxu0 0.0
    %921 = vmatprep.subr.mxu0 0.0
    %922 = vmatpush1.msra.mxu0 0.0
    %923 = vmatprep.subr.mxu0 0.0
    %924 = vmatpush1.msra.mxu0 0.0
    %925 = vmatprep.subr.mxu0 0.0
    %926 = vmatpush1.msra.mxu0 0.0
    %927 = vmatprep.subr.mxu0 0.0
    %928 = vmatpush1.msra.mxu0 0.0
    %929 = vmatprep.subr.mxu0 0.0
    %930 = vmatpush1.msra.mxu0 0.0
    %931 = vmatprep.subr.mxu0 0.0
    %v932 = vand.u32 %v48, 4294901760
    %933 = vmatpush1.msra.mxu0 %v932
    %934 = vmatprep.subr.mxu0 0.0
    %935 = vmatpush2.msra.mxu0 0.0
    %936 = vmatprep.subr.mxu0 0.0
    %937 = vmatpush2.msra.mxu0 0.0
    %938 = vmatprep.subr.mxu0 0.0
    %939 = vmatpush2.msra.mxu0 0.0
    %940 = vmatprep.subr.mxu0 0.0
    %941 = vmatpush2.msra.mxu0 0.0
    %942 = vmatprep.subr.mxu0 0.0
    %943 = vmatpush2.msra.mxu0 0.0
    %944 = vmatprep.subr.mxu0 0.0
    %945 = vmatpush2.msra.mxu0 0.0
    %946 = vmatprep.subr.mxu0 0.0
    %947 = vmatpush2.msra.mxu0 0.0
    %948 = vmatprep.subr.mxu0 0.0
    %949 = vmatpush2.msra.mxu0 0.0
    %950 = vmatprep.subr.mxu0 0.0
    %951 = vmatpush2.msra.mxu0 0.0
    %952 = vmatprep.subr.mxu0 0.0
    %953 = vmatpush2.msra.mxu0 0.0
    %954 = vmatprep.subr.mxu0 0.0
    %955 = vmatpush2.msra.mxu0 0.0
    %956 = vmatprep.subr.mxu0 0.0
    %957 = vmatpush2.msra.mxu0 0.0
    %958 = vmatprep.subr.mxu0 0.0
    %959 = vmatpush2.msra.mxu0 0.0
    %960 = vmatprep.subr.mxu0 0.0
    %961 = vmatpush2.msra.mxu0 0.0
    %962 = vmatprep.subr.mxu0 0.0
    %963 = vmatpush2.msra.mxu0 0.0
    %964 = vmatprep.subr.mxu0 0.0
    %965 = vmatpush2.msra.mxu0 0.0
    %966 = vmatprep.mubr.f32.mxu0 0.0
    %v967 = vand.u32 %v525, 4294901760
    %968 = vmatmul.mubr.f32.gmra.mxu0 %v967
    %v969 = vpop.f32.mrf.mxu0
    %v970 = vadd.f32 %v898, %v969
    %v971 = vpop.f32.mrf.mxu0
    %972 = vdwg.mxu0
    %v973 = vld [vmem:[#allocation2] sm:$0x3]
    %v976 = vrot.slane %v970, 7
    %vm977 = vcmask 1041409
    %v978 = vsel %vm977, %v976, %v522
    %v980 = vadd.f32 %v973, %v978
    %vm981 = vcmask 254976
    %982 = vst.msk [vmem:[#allocation2] sm:$0x3] %vm981, %v980
    %v983 = vld [vmem:[#allocation3] sm:$0x3]
    %vm984 = vcmask 58368
    %v985 = vsel %vm984, %v52, 0.0
    %986 = vadd.xlane.f32.xlu0 %v985
    %v987 = vpop.xlane.xlu0 %986
    %v988 = vadd.f32 %v983, %v987
    %vm989 = vcmask 1024
    %990 = vst.msk [vmem:[#allocation3] sm:$0x3] %vm989, %v988
    // Predicated region
    $region22: #{tpu_custom_call.1} parent=1 // pred_check
      %p991 = pneg %p38
    $region23: #{tpu_custom_call.1} parent=1 // pred_check_branch
      %993 = sbr.rel (%p991) target = $region25
    $region24: #{tpu_custom_call.1} parent=1 // pred_region
      %v994 = vld [vmem:[#allocation2] sm:$0x3]
      %v995 = vld [vmem:[#allocation3] sm:$0x3]
      %v996 = vrcp.pop %v995
      %998 = vset.pattern.permute.xlu0 0
      %999 = vperm.xlu0 %998, %v996
      %v1000 = vpop.permute.xlu0 %999
      %v1002 = vmul.f32 %v994, %v1000
      %1003 = vst.msk [vmem:[#allocation9] sm:$0x3] %vm981, %v1002
    $region25: #{tpu_custom_call.1} parent=1 // pred_fallthru
      _
    // Predicated region
    $region26: #{tpu_custom_call.1} parent=1 // pred_check
      _
    $region27: #{tpu_custom_call.1} parent=1 // pred_check_branch
      %1005 = sbr.rel (0) target = $region29
    $region28: #{tpu_custom_call.1} parent=1 // pred_region
      %s1007 = ssub.s32 32, 32
      %1008 = vsyncadd [#allocation6], %s1007
      %s1010 = sshll.u32 [#allocation9], 4
      %s1011 = int_to_ptr.vmem [resolvable:$true] %s1010
      %1013 = dma.vmem_to_hbm [thread:$0]  %s1011, 32, %s2, [#allocation6]
    $region29: #{tpu_custom_call.1} parent=1 // pred_fallthru
      _
    // Predicated region
    $region30: #{tpu_custom_call.1} parent=1 // pred_check
      _
    $region31: #{tpu_custom_call.1} parent=1 // pred_check_branch
      %1015 = sbr.rel (0) target = $region33
    $region32: #{tpu_custom_call.1} parent=1 // pred_region
      %1016 = dma.done [#allocation6], 32
    $region33: #{tpu_custom_call.1} parent=1 // pred_fallthru
      _
    %1017 = vsyncpa [#allocation5], 1
    %1018 = vsyncpa [#allocation8], 1
    %1019 = vsyncpa [#allocation6], 1

</llo_original>
